<compile_context>
chip_gen: v7x
topology: tpu7x:2x2x1
jax: 0.10.0
libtpu: 0.0.40
codegen_flags: <defaults>
</compile_context>

<pallas_src>
import jax
import jax.numpy as jnp
from jax.experimental import pallas as pl
from jax.experimental.pallas import tpu as pltpu

_LANES = 512                         # lane (last) dim of every tile: multiple of 128 -> unmasked vst
_SUBLANE_PAD = 32                    # tm granularity; covers f32(8)/bf16(16)/int8(32) sublane packing
_TARGET_TILE_BYTES = 4 * 1024 * 1024  # ~4 MiB per tile -> ~16 MiB resident with double buffering
_MIN_GRID_STEPS = 8                  # keep the auto-pipeliner + megacore busy on mid-size inputs
_MIN_PALLAS_ELEMS = 32 * _LANES      # below ~16K elements, plain XLA wins (launch/DMA overhead)
_VMEM_LIMIT_BYTES = 48 * 1024 * 1024  # < v7x 64 MiB physical; lifts v5e's 16 MiB default scoped


def _add_one_kernel(x_ref, o_ref):
    # Elementwise +1 on the VPU with a dtype-matched constant (no promotion).
    o_ref[...] = x_ref[...] + jnp.asarray(1, dtype=o_ref.dtype)


def _round_up(a, m):
    return ((a + m - 1) // m) * m


def add_one(x):
    """Applies `x + 1` via a tiled, pipelined Pallas TPU kernel.

    Accepts any shape/rank. Tiny inputs (including 0-d scalars) take a plain
    XLA fast path. Sizes that are a multiple of 512 run with zero layout
    copies; ragged sizes are padded by at most 511 elements and sliced back.
    """
    x = jnp.asarray(x)
    n = x.size

    # Fast path: scalars / tiny tensors -- Pallas launch + DMA dominates.
    if n < _MIN_PALLAS_ELEMS:
        return x + jnp.asarray(1, dtype=x.dtype)

    itemsize = jnp.dtype(x.dtype).itemsize

    aligned = (n % _LANES) == 0
    if aligned:
        # Pure reshape of a contiguous array: no HBM copy.
        x2d = x.reshape(-1, _LANES)
    else:
        rows = pl.cdiv(n, _LANES)
        flat = x.reshape(-1)
        x2d = jnp.pad(flat, (0, rows * _LANES - n)).reshape(rows, _LANES)

    rows = x2d.shape[0]

    # Per-tile byte budget ~4 MiB, scaled inversely with dtype width.
    max_tm = max(
        _SUBLANE_PAD,
        (_TARGET_TILE_BYTES // (_LANES * itemsize)) // _SUBLANE_PAD * _SUBLANE_PAD,
    )
    # Aim for >= _MIN_GRID_STEPS grid steps so DMA-in / compute / DMA-out
    # overlap and both v7x TensorCores get work; cap by the tile byte budget.
    tm = _round_up(pl.cdiv(rows, _MIN_GRID_STEPS), _SUBLANE_PAD)
    tm = max(_SUBLANE_PAD, min(tm, max_tm))

    grid = (pl.cdiv(rows, tm),)  # ragged last block is masked by Pallas

    out2d = pl.pallas_call(
        _add_one_kernel,
        out_shape=jax.ShapeDtypeStruct(x2d.shape, x2d.dtype),
        grid=grid,
        in_specs=[pl.BlockSpec((tm, _LANES), lambda i: (i, 0))],
        out_specs=pl.BlockSpec((tm, _LANES), lambda i: (i, 0)),
        compiler_params=pltpu.CompilerParams(
            dimension_semantics=("parallel",),
            vmem_limit_bytes=_VMEM_LIMIT_BYTES,
        ),
    )(x2d)

    if aligned:
        return out2d.reshape(x.shape)
    return out2d.reshape(-1)[:n].reshape(x.shape)


if __name__ == "__main__":
    key = jax.random.PRNGKey(0)
    key_a, key_b = jax.random.split(key)

    # 1) Exact module spec: x = torch.tensor(1)  ->  0-d int scalar (XLA path).
    x_scalar = jnp.asarray(1, dtype=jnp.int32)
    out_scalar = add_one(x_scalar)
    jax.block_until_ready(out_scalar)
    assert out_scalar.shape == x_scalar.shape and out_scalar.dtype == x_scalar.dtype
    assert int(out_scalar) == 2, f"scalar: got {out_scalar}, expected 2"

    # 2) Aligned tensor exercising the zero-copy Pallas path (65536 elems,
    #    rows=128, tm=32, grid=4 -> pipelined + megacore-shardable).
    x_aligned = jax.random.normal(key_a, (2, 4, 64, 128), dtype=jnp.float32)
    out_aligned = add_one(x_aligned)
    jax.block_until_ready(out_aligned)
    assert out_aligned.shape == x_aligned.shape and out_aligned.dtype == x_aligned.dtype
    assert jnp.allclose(out_aligned, x_aligned + 1.0), "aligned: mismatch vs reference"

    # 3) Ragged tensor exercising the minimal-pad + masked-last-block path.
    x_ragged = jax.random.normal(key_b, (3, 137, 71), dtype=jnp.float32)
    out_ragged = add_one(x_ragged)
    jax.block_until_ready(out_ragged)
    assert out_ragged.shape == x_ragged.shape
    assert jnp.allclose(out_ragged, x_ragged + 1.0), "ragged: mismatch vs reference"

    print("KERNEL_OK")
</pallas_src>

<mosaic_0001>
module attributes {stable_mosaic.version = 11 : i64} {
  func.func @_add_one_kernel(%arg0: i32, %arg1: memref<32x512xf32, #tpu.memory_space<vmem>>, %arg2: memref<32x512xf32, #tpu.memory_space<vmem>>) attributes {dimension_semantics = [#tpu.dimension_semantics<parallel>], iteration_bounds = array<i64: 4>, scalar_prefetch = 0 : i64, scratch_operands = 0 : i64, tpu.core_type = #tpu.core_type<tc>, window_params = [{transform_indices = @transform_0, window_bounds = array<i64: 32, 512>}, {transform_indices = @transform_1, window_bounds = array<i64: 32, 512>}]} {
    %c0 = arith.constant 0 : index
    %c0_0 = arith.constant 0 : index
    %0 = vector.load %arg1[%c0, %c0_0] : memref<32x512xf32, #tpu.memory_space<vmem>>, vector<32x512xf32>
    %cst = arith.constant 1.000000e+00 : f32
    %1 = vector.broadcast %cst : f32 to vector<32x512xf32>
    %2 = arith.addf %0, %1 : vector<32x512xf32>
    %c0_1 = arith.constant 0 : index
    %c0_2 = arith.constant 0 : index
    %3 = vector.load %arg2[%c0_1, %c0_2] : memref<32x512xf32, #tpu.memory_space<vmem>>, vector<32x512xf32>
    tpu.vector_store %arg2[%c0_1, %c0_2], %2 {strides = array<i32>} : memref<32x512xf32, #tpu.memory_space<vmem>>, vector<32x512xf32>,
    return
  }
  func.func @transform_0(%arg0: i32) -> (i32, i32) {
    %c0_i32 = arith.constant 0 : i32
    %c0_i32_0 = arith.constant 0 : i32
    return %arg0, %c0_i32 : i32, i32
  }
  func.func @transform_1(%arg0: i32) -> (i32, i32) {
    %c0_i32 = arith.constant 0 : i32
    %c0_i32_0 = arith.constant 0 : i32
    return %arg0, %c0_i32 : i32, i32
  }
}

</mosaic_0001>

<llo_original>
// kernel: tpu_custom_call.1
$region0: #{tpu_custom_call.1}
  #allocation0 [shape = 'u32[]', space=smem, size = 0x4, offset = 0x4, fixed_abs, tag = 'smem constant byte address 0x4 - core index']
  #allocation1 [shape = 'u32[144,128]{1,0:T(1,128)}', space=vmem, size = 0x12000, scoped, tag = 'internal scratch']
  %s0 = inlined_call_operand.hbm [shape: f32[128,512], index: 0, kind: input, shape index: {}]
  %s1 = inlined_call_operand.hbm [shape: f32[128,512], index: 1, kind: output, shape index: {}]
  %s2 = sld [smem:[#allocation0]]
  $region41: #{tpu_custom_call.1} parent=0
    _
  %s4 = ssub.s32 1, %s2
  %s5 = scalar_select 0, %s4, %s2
  $region1: #{tpu_custom_call.1} parent=0
    #allocation2 [shape = 'u8[131072]{0}', space=vmem, size = 0x20000, scoped, tag = 'input window, operand 0']
    #allocation3 [shape = 's32[2]{0}', space=sflag, size = 0x8, scoped, tag = 'scoped memory for tpu_custom_call.1']
    #allocation4 [shape = 's32[2]{0}', space=sflag, size = 0x8, scoped, tag = 'scoped memory for tpu_custom_call.1']
    #allocation5 [shape = 'u8[131072]{0}', space=vmem, size = 0x20000, scoped, tag = 'output window, operand 0']
    %6 = vsyncpa [#allocation3], 0
    %s7 = scalar_lea.sflag [#allocation3], 1
    %8 = vsyncpa %s7, 0
    %9 = vsyncpa [#allocation4], 0
    %s10 = scalar_lea.sflag [#allocation4], 1
    %11 = vsyncpa %s10, 0
    loop: start=0, step=1, limit=6
    $region2: #{tpu_custom_call.1} parent=1 // loop_pre_header
      _
    $region3: #{tpu_custom_call.1} parent=1 // loop_header
      %s13 = sphi 0, %s17
      %p14 = scmp.ge.s32.totalorder %s13, 6
      %s23 = sphi 0, %s25
      %s26 = sphi 0, %s23
      %s27 = sphi 0, %s26
      %s43 = sphi 0, %s27
      %s49 = sphi 0, %s51
      %s52 = sphi 0, %s49
      %s53 = sphi 0, %s52
      %s69 = sphi 0, %s53
    $region4: #{tpu_custom_call.1} parent=1 // loop_header_branch
      %16 = sbr.rel (%p14) target = $region8
    $region5: #{tpu_custom_call.1} parent=1 // loop_body
      %s18 = ssub.s32 %s13, 1
      %s19 = ssub.s32 %s13, 2
      %s20 = sadd.s32 %s13, 1
      %s21 = ssub.s32 %s13, %s20
      %p22 = scmp.eq.s32.totalorder %s21, 0
      %s24 = sadd.s32 %s23, 1
      %s25 = scalar_select %p22, %s23, %s24
      %p28 = pneg %p22
      %p29 = scmp.eq.s32.totalorder %s13, 3
      %p30 = por %p28, %p29
      %p31 = scmp.ne.s32.totalorder %s23, %s26
      %p32 = scmp.eq.s32.totalorder %s13, 0
      %p33 = por %p31, %p32
      %p34 = scmp.ne.s32.totalorder %s23, %s26
      %p35 = scmp.eq.s32.totalorder %s18, 3
      %p36 = por %p34, %p35
      %p37 = scmp.ne.s32.totalorder %s26, %s27
      %p38 = scmp.eq.s32.totalorder %s18, 0
      %p39 = por %p37, %p38
      %p40 = scmp.ne.s32.totalorder %s26, %s27
      %p41 = scmp.eq.s32.totalorder %s19, 3
      %p42 = por %p40, %p41
      %p44 = scmp.ne.s32.totalorder %s27, %s43
      %p45 = scmp.eq.s32.totalorder %s19, 0
      %p46 = por %p44, %p45
      %s47 = ssub.s32 %s13, %s20
      %p48 = scmp.eq.s32.totalorder %s47, 0
      %s50 = sadd.s32 %s49, 1
      %s51 = scalar_select %p48, %s49, %s50
      %p54 = pneg %p48
      %p55 = scmp.eq.s32.totalorder %s13, 3
      %p56 = por %p54, %p55
      %p57 = scmp.ne.s32.totalorder %s49, %s52
      %p58 = scmp.eq.s32.totalorder %s13, 0
      %p59 = por %p57, %p58
      %p60 = scmp.ne.s32.totalorder %s49, %s52
      %p61 = scmp.eq.s32.totalorder %s18, 3
      %p62 = por %p60, %p61
      %p63 = scmp.ne.s32.totalorder %s52, %s53
      %p64 = scmp.eq.s32.totalorder %s18, 0
      %p65 = por %p63, %p64
      %p66 = scmp.ne.s32.totalorder %s52, %s53
      %p67 = scmp.eq.s32.totalorder %s19, 3
      %p68 = por %p66, %p67
      %p70 = scmp.ne.s32.totalorder %s53, %s69
      %p71 = scmp.eq.s32.totalorder %s19, 0
      %p72 = por %p70, %p71
      %p73 = scmp.le.s32.totalorder 1, %s13
      %p74 = scmp.lt.s32.totalorder %s13, 5
      %p75 = pnand %p73, %p74
      %p76 = pneg %p75
      // Predicated region
      $region9: #{tpu_custom_call.1} parent=5 // pred_check
        _
      $region10: #{tpu_custom_call.1} parent=5 // pred_check_branch
        %78 = sbr.rel (%p75) target = $region12
      $region11: #{tpu_custom_call.1} parent=5 // pred_region
        %s79 = ssub.s32 %s13, 1
      $region12: #{tpu_custom_call.1} parent=5 // pred_fallthru
        _
      %p80 = scmp.lt.s32.totalorder %s13, 4
      // Predicated region
      $region13: #{tpu_custom_call.1} parent=5 // pred_check
        %p81 = pneg %p80
      $region14: #{tpu_custom_call.1} parent=5 // pred_check_branch
        %83 = sbr.rel (%p81) target = $region16
      $region15: #{tpu_custom_call.1} parent=5 // pred_region
        // Predicated region
        $region17: #{tpu_custom_call.1} parent=15 // pred_check
          %p84 = pneg %p33
        $region18: #{tpu_custom_call.1} parent=15 // pred_check_branch
          %86 = sbr.rel (%p84) target = $region20
        $region19: #{tpu_custom_call.1} parent=15 // pred_region
          %s87 = sand.u32 %s23, 1
          %s88 = scalar_lea.sflag [#allocation3], %s87
          %s89 = sand.u32 %s23, 1
          %s90 = smul.addr %s89, 128
          %s91 = scalar_lea.vmem [#allocation2], %s90
          %s92 = smul.u32 4, %s13
          %s94 = ssub.s32 2048, 2048
          %95 = vsyncadd %s88, %s94
          %s96 = smul.addr %s92, 4
          %s97 = smul.addr %s96, 128
          %s98 = scalar_lea.hbm %s0, %s97
          %s99 = sshll.u32 %s91, 4
          %s100 = int_to_ptr.vmem [resolvable:$true] %s99
          %105 = dma.hbm_to_vmem [thread:$0]  %s98, 2048, %s100, %s88, 512, 512, 32
        $region20: #{tpu_custom_call.1} parent=15 // pred_fallthru
          _
      $region16: #{tpu_custom_call.1} parent=5 // pred_fallthru
        _
      %p106 = scmp.le.s32.totalorder 1, %s13
      %p107 = scmp.lt.s32.totalorder %s13, 5
      %p108 = pnand %p106, %p107
      %p109 = pneg %p108
      // Predicated region
      $region21: #{tpu_custom_call.1} parent=5 // pred_check
        _
      $region22: #{tpu_custom_call.1} parent=5 // pred_check_branch
        %111 = sbr.rel (%p108) target = $region24
      $region23: #{tpu_custom_call.1} parent=5 // pred_region
        %s112 = ssub.s32 %s13, 1
        %s113 = sand.u32 %s26, 1
        %s114 = scalar_lea.sflag [#allocation3], %s113
        %s115 = sand.u32 %s26, 1
        %s116 = smul.addr %s115, 128
        %s117 = scalar_lea.vmem [#allocation2], %s116
        // Predicated region
        $region25: #{tpu_custom_call.1} parent=23 // pred_check
          %p118 = pneg %p39
        $region26: #{tpu_custom_call.1} parent=23 // pred_check_branch
          %120 = sbr.rel (%p118) target = $region28
        $region27: #{tpu_custom_call.1} parent=23 // pred_region
          %121 = dma.done %s114, 2048
        $region28: #{tpu_custom_call.1} parent=23 // pred_fallthru
          _
        %s122 = sand.u32 %s26, 1
        %s123 = scalar_lea.sflag [#allocation3], %s122
        %s124 = sand.u32 %s26, 1
        %s125 = smul.addr %s124, 128
        %s126 = scalar_lea.vmem [#allocation2], %s125
        %p127 = pneg %p39
        %p128 = pneg %p36
        %p129 = pneg %p65
        %p130 = pneg %p62
        %s131 = sand.u32 %s52, 1
        %s132 = scalar_lea.sflag [#allocation4], %s131
        %s133 = sand.u32 %s52, 1
        %s134 = smul.addr %s133, 128
        %s135 = scalar_lea.vmem [#allocation5], %s134
        %s136 = smul.u32 4, %s18
        %s137 = smul.u32 4, %s18
        %v138 = vld [vmem:[%s117] sm:$0xff]
        %v139 = vld [vmem:[%s117 + $0x8] sm:$0xff]
        %v140 = vld [vmem:[%s117 + $0x10] sm:$0xff]
        %v141 = vld [vmem:[%s117 + $0x18] sm:$0xff]
        %v142 = vld [vmem:[%s117 + $0x20] sm:$0xff]
        %v143 = vld [vmem:[%s117 + $0x28] sm:$0xff]
        %v144 = vld [vmem:[%s117 + $0x30] sm:$0xff]
        %v145 = vld [vmem:[%s117 + $0x38] sm:$0xff]
        %v146 = vld [vmem:[%s117 + $0x40] sm:$0xff]
        %v147 = vld [vmem:[%s117 + $0x48] sm:$0xff]
        %v148 = vld [vmem:[%s117 + $0x50] sm:$0xff]
        %v149 = vld [vmem:[%s117 + $0x58] sm:$0xff]
        %v150 = vld [vmem:[%s117 + $0x60] sm:$0xff]
        %v151 = vld [vmem:[%s117 + $0x68] sm:$0xff]
        %v152 = vld [vmem:[%s117 + $0x70] sm:$0xff]
        %v153 = vld [vmem:[%s117 + $0x78] sm:$0xff]
        %v154 = vadd.f32 %v138, 1.0
        %v155 = vadd.f32 %v139, 1.0
        %v156 = vadd.f32 %v140, 1.0
        %v157 = vadd.f32 %v141, 1.0
        %v158 = vadd.f32 %v142, 1.0
        %v159 = vadd.f32 %v143, 1.0
        %v160 = vadd.f32 %v144, 1.0
        %v161 = vadd.f32 %v145, 1.0
        %v162 = vadd.f32 %v146, 1.0
        %v163 = vadd.f32 %v147, 1.0
        %v164 = vadd.f32 %v148, 1.0
        %v165 = vadd.f32 %v149, 1.0
        %v166 = vadd.f32 %v150, 1.0
        %v167 = vadd.f32 %v151, 1.0
        %v168 = vadd.f32 %v152, 1.0
        %v169 = vadd.f32 %v153, 1.0
        %170 = vst [vmem:[%s135] sm:$0xff] %v154
        %171 = vst [vmem:[%s135 + $0x8] sm:$0xff] %v155
        %172 = vst [vmem:[%s135 + $0x10] sm:$0xff] %v156
        %173 = vst [vmem:[%s135 + $0x18] sm:$0xff] %v157
        %174 = vst [vmem:[%s135 + $0x20] sm:$0xff] %v158
        %175 = vst [vmem:[%s135 + $0x28] sm:$0xff] %v159
        %176 = vst [vmem:[%s135 + $0x30] sm:$0xff] %v160
        %177 = vst [vmem:[%s135 + $0x38] sm:$0xff] %v161
        %178 = vst [vmem:[%s135 + $0x40] sm:$0xff] %v162
        %179 = vst [vmem:[%s135 + $0x48] sm:$0xff] %v163
        %180 = vst [vmem:[%s135 + $0x50] sm:$0xff] %v164
        %181 = vst [vmem:[%s135 + $0x58] sm:$0xff] %v165
        %182 = vst [vmem:[%s135 + $0x60] sm:$0xff] %v166
        %183 = vst [vmem:[%s135 + $0x68] sm:$0xff] %v167
        %184 = vst [vmem:[%s135 + $0x70] sm:$0xff] %v168
        %185 = vst [vmem:[%s135 + $0x78] sm:$0xff] %v169
        %s186 = sand.u32 %s52, 1
        %s187 = scalar_lea.sflag [#allocation4], %s186
        %s188 = sand.u32 %s52, 1
        %s189 = smul.addr %s188, 128
        %s190 = scalar_lea.vmem [#allocation5], %s189
        // Predicated region
        $region29: #{tpu_custom_call.1} parent=23 // pred_check
          %p191 = pneg %p62
        $region30: #{tpu_custom_call.1} parent=23 // pred_check_branch
          %193 = sbr.rel (%p191) target = $region32
        $region31: #{tpu_custom_call.1} parent=23 // pred_region
          %s194 = smul.u32 4, %s18
          %s196 = ssub.s32 2048, 2048
          %197 = vsyncadd %s187, %s196
          %s198 = smul.addr %s194, 4
          %s199 = smul.addr %s198, 128
          %s200 = scalar_lea.hbm %s1, %s199
          %s201 = sshll.u32 %s190, 4
          %s202 = int_to_ptr.vmem [resolvable:$true] %s201
          %207 = dma.vmem_to_hbm [thread:$0]  %s202, 2048, %s200, %s187, 512, 512, 32
        $region32: #{tpu_custom_call.1} parent=23 // pred_fallthru
          _
      $region24: #{tpu_custom_call.1} parent=5 // pred_fallthru
        _
      %p208 = scmp.le.s32.totalorder 2, %s13
      // Predicated region
      $region33: #{tpu_custom_call.1} parent=5 // pred_check
        %p209 = pneg %p208
      $region34: #{tpu_custom_call.1} parent=5 // pred_check_branch
        %211 = sbr.rel (%p209) target = $region36
      $region35: #{tpu_custom_call.1} parent=5 // pred_region
        %s212 = ssub.s32 %s13, 2
        // Predicated region
        $region37: #{tpu_custom_call.1} parent=35 // pred_check
          %p213 = pneg %p68
        $region38: #{tpu_custom_call.1} parent=35 // pred_check_branch
          %215 = sbr.rel (%p213) target = $region40
        $region39: #{tpu_custom_call.1} parent=35 // pred_region
          %s216 = sand.u32 %s53, 1
          %s217 = scalar_lea.sflag [#allocation4], %s216
          %s218 = sand.u32 %s53, 1
          %s219 = smul.addr %s218, 128
          %s220 = scalar_lea.vmem [#allocation5], %s219
          %221 = dma.done %s217, 2048
        $region40: #{tpu_custom_call.1} parent=35 // pred_fallthru
          _
      $region36: #{tpu_custom_call.1} parent=5 // pred_fallthru
        _
    $region6: #{tpu_custom_call.1} parent=1 // loop_footer
      %s17 = sadd.s32 1, %s13
    $region7: #{tpu_custom_call.1} parent=1 // loop_footer_branch
      %12 = sbr.rel target = $region3
    $region8: #{tpu_custom_call.1} parent=1 // loop_exit
      _
    %222 = vsyncpa [#allocation3], 1
    %s223 = scalar_lea.sflag [#allocation3], 1
    %224 = vsyncpa %s223, 1
    %225 = vsyncpa [#allocation4], 1
    %s226 = scalar_lea.sflag [#allocation4], 1
    %227 = vsyncpa %s226, 1

</llo_original>
